<compile_context>
chip_gen: v6e
topology: v6e:2x2x1
jax: 0.10.0
libtpu: 0.0.40
codegen_flags: <defaults>
</compile_context>

<pallas_src>
import functools

import jax
import jax.numpy as jnp
from jax.experimental import pallas as pl
from jax.experimental.pallas import tpu as pltpu


def _adain_kernel(x_ref, w_ref, b_ref, o_ref, *, eps):
    # x_ref: (rt, HW) block; each row is one (n, c) channel, spatial on lanes.
    x = x_ref[...].astype(jnp.float32)

    hw = x.shape[-1]
    inv_n = jnp.float32(1.0 / hw)

    # Fused single-pass statistics (one read of x, no full-size diff temp).
    s = jnp.sum(x, axis=-1, keepdims=True)           # (rt, 1)
    ss = jnp.sum(x * x, axis=-1, keepdims=True)      # (rt, 1)
    mean = s * inv_n
    var = jnp.maximum(ss * inv_n - mean * mean, 0.0)  # biased variance (batch_norm training)

    # Tiny (rt, 1) exact inverse-std; per-element cost below is one FMA.
    inv_std = jnp.float32(1.0) / jnp.sqrt(var + jnp.float32(eps))

    w = w_ref[...].astype(jnp.float32)               # (rt, 1)
    b = b_ref[...].astype(jnp.float32)               # (rt, 1)
    scale = inv_std * w
    shift = b - mean * scale

    o_ref[...] = (x * scale + shift).astype(o_ref.dtype)


def adaptive_instance_norm_2d(x, weight, bias, eps=1e-5):
    """x: (N, C, H, W); weight/bias: (N*C,) dynamically-assigned AdaIN affine."""
    N, C, H, W = x.shape
    NC, HW = N * C, H * W
    assert weight.shape == (NC,) and bias.shape == (NC,)
    assert HW > 1, "degenerate spatial extent"

    # Lane-dense 2-D view: rows = (n, c) channels, columns = spatial.
    x2 = x.reshape(NC, HW)
    w2 = weight.reshape(NC, 1)
    b2 = bias.reshape(NC, 1)

    # Row tile: multiple of 8 (sublane), sized against a ~4 MiB per-buffer budget.
    itemsize = x2.dtype.itemsize
    if NC <= 8:
        rt = NC
    else:
        budget_rows = max(8, (4 * 1024 * 1024) // (HW * max(itemsize, 4)))
        rt = min(NC, (budget_rows // 8) * 8, 512)
        rt = max(rt, 8)
    grid = (pl.cdiv(NC, rt),)

    # VMEM budget: in + out blocks, double-buffered, plus f32 compute headroom.
    block_bytes = rt * HW * itemsize
    vmem_limit = 4 * block_bytes + rt * HW * 4 + (2 << 20)
    vmem_limit = int(min(max(vmem_limit, 16 * 1024 * 1024), 64 * 1024 * 1024))

    # TODO(synk): for H*W so large that a single 8-row tile exceeds the VMEM
    # budget, switch to a two-pass structure (tiled sum/sumsq reduction over a
    # spatial grid axis, then a second normalize sweep).

    kernel = functools.partial(_adain_kernel, eps=eps)

    out = pl.pallas_call(
        kernel,
        out_shape=jax.ShapeDtypeStruct((NC, HW), x.dtype),
        grid_spec=pltpu.PrefetchScalarGridSpec(
            num_scalar_prefetch=0,
            grid=grid,
            in_specs=[
                pl.BlockSpec((rt, HW), lambda i: (i, 0)),
                pl.BlockSpec((rt, 1), lambda i: (i, 0)),
                pl.BlockSpec((rt, 1), lambda i: (i, 0)),
            ],
            out_specs=pl.BlockSpec((rt, HW), lambda i: (i, 0)),
        ),
        compiler_params=pltpu.CompilerParams(
            dimension_semantics=("parallel",),
            vmem_limit_bytes=vmem_limit,
        ),
        cost_estimate=pl.CostEstimate(
            flops=6 * NC * HW,
            transcendentals=NC,
            bytes_accessed=2 * NC * HW * itemsize + 2 * NC * 4,
        ),
    )(x2, w2, b2)

    return out.reshape(N, C, H, W)


def adain_reference(x, weight, bias, eps=1e-5):
    """Pure-JAX reference matching the PyTorch forward (F.batch_norm, training)."""
    N, C, H, W = x.shape
    xr = x.reshape(N * C, H * W).astype(jnp.float32)
    mean = xr.mean(axis=1, keepdims=True)
    var = xr.var(axis=1, keepdims=True)  # biased (ddof=0), as batch_norm training uses
    y = (xr - mean) / jnp.sqrt(var + eps)
    y = y * weight.reshape(-1, 1) + bias.reshape(-1, 1)
    return y.reshape(N, C, H, W).astype(x.dtype)


if __name__ == "__main__":
    key = jax.random.PRNGKey(0)
    kx, kw, kb = jax.random.split(key, 3)

    # Small NCHW feature map consistent with the module.
    N, C, H, W = 2, 4, 16, 16
    x = jax.random.normal(kx, (N, C, H, W), dtype=jnp.float32)

    # AdaIN weight/bias are assigned externally (e.g. from a style MLP),
    # flattened to shape (N * C,): weight ~ positive scale, bias ~ shift.
    weight = jax.random.uniform(kw, (N * C,), dtype=jnp.float32, minval=0.5, maxval=1.5)
    bias = jax.random.normal(kb, (N * C,), dtype=jnp.float32)

    out = adaptive_instance_norm_2d(x, weight, bias)
    out = jax.block_until_ready(out)

    ref = adain_reference(x, weight, bias)
    assert out.shape == (N, C, H, W)
    assert jnp.allclose(out, ref, atol=1e-5, rtol=1e-5), "mismatch vs reference"

    print("KERNEL_OK")
</pallas_src>

<mosaic_0001>
module attributes {stable_mosaic.version = 11 : i64} {
  func.func @_adain_kernel(%arg0: i32, %arg1: memref<8x256xf32, #tpu.memory_space<vmem>>, %arg2: memref<8x1xf32, #tpu.memory_space<vmem>>, %arg3: memref<8x1xf32, #tpu.memory_space<vmem>>, %arg4: memref<8x256xf32, #tpu.memory_space<vmem>>) attributes {dimension_semantics = [#tpu.dimension_semantics<parallel>], iteration_bounds = array<i64: 1>, scalar_prefetch = 0 : i64, scratch_operands = 0 : i64, tpu.core_type = #tpu.core_type<tc>, window_params = [{transform_indices = @transform_0, window_bounds = array<i64: 8, 256>}, {transform_indices = @transform_1, window_bounds = array<i64: 8, 1>}, {transform_indices = @transform_2, window_bounds = array<i64: 8, 1>}, {transform_indices = @transform_3, window_bounds = array<i64: 8, 256>}]} {
    %c0 = arith.constant 0 : index
    %c0_0 = arith.constant 0 : index
    %0 = vector.load %arg1[%c0, %c0_0] : memref<8x256xf32, #tpu.memory_space<vmem>>, vector<8x256xf32>
    %cst = arith.constant dense<0.000000e+00> : vector<8xf32>
    %1 = vector.multi_reduction <add>, %0, %cst [1] : vector<8x256xf32> to vector<8xf32>
    %2 = vector.shape_cast %1 : vector<8xf32> to vector<8x1xf32>
    %3 = arith.mulf %0, %0 : vector<8x256xf32>
    %cst_1 = arith.constant dense<0.000000e+00> : vector<8xf32>
    %4 = vector.multi_reduction <add>, %3, %cst_1 [1] : vector<8x256xf32> to vector<8xf32>
    %5 = vector.shape_cast %4 : vector<8xf32> to vector<8x1xf32>
    %cst_2 = arith.constant 3.906250e-03 : f32
    %6 = vector.broadcast %cst_2 : f32 to vector<8x1xf32>
    %7 = arith.mulf %2, %6 : vector<8x1xf32>
    %cst_3 = arith.constant 3.906250e-03 : f32
    %8 = vector.broadcast %cst_3 : f32 to vector<8x1xf32>
    %9 = arith.mulf %5, %8 : vector<8x1xf32>
    %10 = arith.mulf %7, %7 : vector<8x1xf32>
    %11 = arith.subf %9, %10 : vector<8x1xf32>
    %cst_4 = arith.constant 0.000000e+00 : f32
    %12 = vector.broadcast %cst_4 : f32 to vector<8x1xf32>
    %13 = arith.maximumf %11, %12 : vector<8x1xf32>
    %cst_5 = arith.constant 9.99999974E-6 : f32
    %14 = vector.broadcast %cst_5 : f32 to vector<8x1xf32>
    %15 = arith.addf %13, %14 : vector<8x1xf32>
    %16 = math.sqrt %15 : vector<8x1xf32>
    %cst_6 = arith.constant 1.000000e+00 : f32
    %17 = vector.broadcast %cst_6 : f32 to vector<8x1xf32>
    %18 = arith.divf %17, %16 : vector<8x1xf32>
    %c0_7 = arith.constant 0 : index
    %c0_8 = arith.constant 0 : index
    %19 = vector.load %arg2[%c0_7, %c0_8] : memref<8x1xf32, #tpu.memory_space<vmem>>, vector<8x1xf32>
    %c0_9 = arith.constant 0 : index
    %c0_10 = arith.constant 0 : index
    %20 = vector.load %arg3[%c0_9, %c0_10] : memref<8x1xf32, #tpu.memory_space<vmem>>, vector<8x1xf32>
    %21 = arith.mulf %18, %19 : vector<8x1xf32>
    %22 = arith.mulf %7, %21 : vector<8x1xf32>
    %23 = arith.subf %20, %22 : vector<8x1xf32>
    %24 = vector.broadcast %21 : vector<8x1xf32> to vector<8x256xf32>
    %25 = arith.mulf %0, %24 : vector<8x256xf32>
    %26 = vector.broadcast %23 : vector<8x1xf32> to vector<8x256xf32>
    %27 = arith.addf %25, %26 : vector<8x256xf32>
    %c0_11 = arith.constant 0 : index
    %c0_12 = arith.constant 0 : index
    %28 = vector.load %arg4[%c0_11, %c0_12] : memref<8x256xf32, #tpu.memory_space<vmem>>, vector<8x256xf32>
    tpu.vector_store %arg4[%c0_11, %c0_12], %27 {strides = array<i32>} : memref<8x256xf32, #tpu.memory_space<vmem>>, vector<8x256xf32>,
    return
  }
  func.func @transform_0(%arg0: i32) -> (i32, i32) {
    %c0_i32 = arith.constant 0 : i32
    %c0_i32_0 = arith.constant 0 : i32
    return %arg0, %c0_i32 : i32, i32
  }
  func.func @transform_1(%arg0: i32) -> (i32, i32) {
    %c0_i32 = arith.constant 0 : i32
    %c0_i32_0 = arith.constant 0 : i32
    return %arg0, %c0_i32 : i32, i32
  }
  func.func @transform_2(%arg0: i32) -> (i32, i32) {
    %c0_i32 = arith.constant 0 : i32
    %c0_i32_0 = arith.constant 0 : i32
    return %arg0, %c0_i32 : i32, i32
  }
  func.func @transform_3(%arg0: i32) -> (i32, i32) {
    %c0_i32 = arith.constant 0 : i32
    %c0_i32_0 = arith.constant 0 : i32
    return %arg0, %c0_i32 : i32, i32
  }
}

</mosaic_0001>

<llo_original>
// kernel: tpu_custom_call.1
$region0: #{tpu_custom_call.1}
  #allocation0 [shape = 'u32[]', space=smem, size = 0x4, offset = 0x4, fixed_abs, tag = 'smem constant byte address 0x4 - core index']
  #allocation1 [shape = 'u32[144,128]{1,0:T(1,128)}', space=vmem, size = 0x12000, scoped, tag = 'internal scratch']
  %s0 = inlined_call_operand.vmem [shape: f32[8,256], index: 0, kind: input, shape index: {}]
  %s1 = inlined_call_operand.vmem [shape: f32[8,1], index: 1, kind: input, shape index: {}]
  %s2 = inlined_call_operand.vmem [shape: f32[8,1], index: 2, kind: input, shape index: {}]
  %s3 = inlined_call_operand.hbm [shape: f32[8,256], index: 3, kind: output, shape index: {}]
  %s4 = sld [smem:[#allocation0]]
  $region22: #{tpu_custom_call.1} parent=0
    _
  %s6 = ssub.s32 1, %s4
  %s7 = scalar_select 0, %s6, %s4
  $region1: #{tpu_custom_call.1} parent=0
    #allocation2 [shape = 'u8[8192]{0}', space=vmem, size = 0x2000, scoped, tag = 'output window, operand 0, single buffered']
    #allocation3 [shape = 's32[1]{0}', space=sflag, size = 0x4, scoped, tag = 'scoped memory for tpu_custom_call.1']
    %8 = vsyncpa [#allocation3], 0
    // Predicated region
    $region2: #{tpu_custom_call.1} parent=1 // pred_check
      _
    $region3: #{tpu_custom_call.1} parent=1 // pred_check_branch
      %10 = sbr.rel (0) target = $region5
    $region4: #{tpu_custom_call.1} parent=1 // pred_region
      _
    $region5: #{tpu_custom_call.1} parent=1 // pred_fallthru
      _
    // Predicated region
    $region6: #{tpu_custom_call.1} parent=1 // pred_check
      _
    $region7: #{tpu_custom_call.1} parent=1 // pred_check_branch
      %12 = sbr.rel (0) target = $region9
    $region8: #{tpu_custom_call.1} parent=1 // pred_region
      _
    $region9: #{tpu_custom_call.1} parent=1 // pred_fallthru
      _
    // Predicated region
    $region10: #{tpu_custom_call.1} parent=1 // pred_check
      _
    $region11: #{tpu_custom_call.1} parent=1 // pred_check_branch
      %14 = sbr.rel (0) target = $region13
    $region12: #{tpu_custom_call.1} parent=1 // pred_region
      _
    $region13: #{tpu_custom_call.1} parent=1 // pred_fallthru
      _
    %v15 = vld [vmem:[%s0] sm:$0xff]
    %v16 = vld [vmem:[%s0 + $0x8] sm:$0xff]
    %v17 = vadd.f32 %v15, %v16
    %18 = vadd.xlane.f32.xlu0 %v17
    %v19 = vpop.xlane.xlu0 %18
    %v20 = vmul.f32 %v15, %v15
    %v21 = vmul.f32 %v16, %v16
    %v22 = vadd.f32 %v20, %v21
    %23 = vadd.xlane.f32.xlu0 %v22
    %v24 = vpop.xlane.xlu0 %23
    %v25 = vmul.f32 %v19, 0.00390625
    %v26 = vmul.f32 %v24, 0.00390625
    %v27 = vmul.f32 %v25, %v25
    %v28 = vsub.f32 %v26, %v27
    %v29 = vmax.f32 %v28, 0.0
    %v30 = vadd.f32 %v29, 1e-05
    %v31 = vrsqrt.pop %v30
    %v32 = vmul.f32 %v30, %v31
    %vm33 = vcmp.eq.f32.partialorder %v30, inf
    %v34 = vsel %vm33, %v30, %v32
    %vm35 = vcmp.eq.f32.partialorder %v30, 0.0
    %v36 = vand.u32 %v30, 2147483648
    %v37 = vsel %vm35, %v36, %v34
    %v38 = vrcp.pop %v37
    %v39 = vmul.f32 1.0, %v38
    %v40 = vld [vmem:[%s1] sm:$0xff]
    %v41 = vld [vmem:[%s2] sm:$0xff]
    %v42 = vmul.f32 %v39, %v40
    %v43 = vmul.f32 %v25, %v42
    %v44 = vsub.f32 %v41, %v43
    %46 = vset.pattern.permute.xlu0 0
    %47 = vperm.xlu0 %46, %v42
    %v48 = vpop.permute.xlu0 %47
    %v50 = vmul.f32 %v15, %v48
    %v51 = vmul.f32 %v16, %v48
    %53 = vset.pattern.permute.xlu0 0
    %54 = vperm.xlu0 %53, %v44
    %v55 = vpop.permute.xlu0 %54
    %v57 = vadd.f32 %v50, %v55
    %v58 = vadd.f32 %v51, %v55
    %59 = vst [vmem:[#allocation2] sm:$0xff] %v57
    %60 = vst [vmem:[#allocation2 + $0x8] sm:$0xff] %v58
    // Predicated region
    $region14: #{tpu_custom_call.1} parent=1 // pred_check
      _
    $region15: #{tpu_custom_call.1} parent=1 // pred_check_branch
      %62 = sbr.rel (0) target = $region17
    $region16: #{tpu_custom_call.1} parent=1 // pred_region
      %s64 = ssub.s32 256, 256
      %65 = vsyncadd [#allocation3], %s64
      %s67 = sshll.u32 [#allocation2], 4
      %s68 = int_to_ptr.vmem [resolvable:$true] %s67
      %70 = dma.vmem_to_hbm [thread:$0]  %s68, 256, %s3, [#allocation3]
    $region17: #{tpu_custom_call.1} parent=1 // pred_fallthru
      _
    // Predicated region
    $region18: #{tpu_custom_call.1} parent=1 // pred_check
      _
    $region19: #{tpu_custom_call.1} parent=1 // pred_check_branch
      %72 = sbr.rel (0) target = $region21
    $region20: #{tpu_custom_call.1} parent=1 // pred_region
      %73 = dma.done [#allocation3], 256
    $region21: #{tpu_custom_call.1} parent=1 // pred_fallthru
      _
    %74 = vsyncpa [#allocation3], 1

</llo_original>
